<compile_context>
chip_gen: v7x
topology: tpu7x:2x2x1
jax: 0.10.0
libtpu: 0.0.40
codegen_flags: <defaults>
</compile_context>

<pallas_src>
import math
import functools

import jax
import jax.numpy as jnp
from jax.experimental import pallas as pl
from jax.experimental.pallas import tpu as pltpu

VMEM_LIMIT = 32 * 1024 * 1024


# ------------------------------ tiling helpers ------------------------------

def _round_up(x, m):
    return (x + m - 1) // m * m


def _choose_tile(n, cap, unit):
    """Largest tile <= cap that divides n and is a multiple of `unit`;
    falls back to the full dimension (always a legal BlockSpec block)."""
    if n <= cap:
        return n
    t = (cap // unit) * unit
    while t >= unit:
        if n % t == 0:
            return t
        t -= unit
    return n


def _pad_rows(x, m_pad):
    m = x.shape[0]
    if m == m_pad:
        return x
    return jnp.pad(x, ((0, m_pad - m), (0, 0)))


# ------------------------------ Pallas kernels ------------------------------

def _rms_scale_kernel(x_ref, o_ref, *, eps):
    x = x_ref[...]
    ms = jnp.mean(x * x, axis=-1, keepdims=True)
    o_ref[...] = jax.lax.rsqrt(ms + eps)


def _rms_mm_kernel(x_ref, g_ref, s_ref, w_ref, o_ref, acc_ref):
    """out = (x * rms_scale * gamma) @ W ; K-accumulated, bf16 MXU, f32 acc."""
    @pl.when(pl.program_id(2) == 0)
    def _():
        acc_ref[...] = jnp.zeros_like(acc_ref)

    xn = (x_ref[...] * s_ref[...] * g_ref[...]).astype(jnp.bfloat16)
    acc_ref[...] += jnp.dot(xn, w_ref[...], preferred_element_type=jnp.float32)

    @pl.when(pl.program_id(2) == pl.num_programs(2) - 1)
    def _():
        o_ref[...] = acc_ref[...].astype(o_ref.dtype)


def _mm_add_kernel(x_ref, w_ref, r_ref, o_ref, acc_ref):
    """out = x @ W + residual ; K-accumulated, bf16 MXU, f32 acc."""
    @pl.when(pl.program_id(2) == 0)
    def _():
        acc_ref[...] = jnp.zeros_like(acc_ref)

    acc_ref[...] += jnp.dot(x_ref[...].astype(jnp.bfloat16), w_ref[...],
                            preferred_element_type=jnp.float32)

    @pl.when(pl.program_id(2) == pl.num_programs(2) - 1)
    def _():
        o_ref[...] = (acc_ref[...] + r_ref[...]).astype(o_ref.dtype)


def _rms_swiglu_kernel(x_ref, g_ref, s_ref, w1_ref, w3_ref, o_ref, acc1, acc3):
    """out = silu((xn) @ W1) * ((xn) @ W3) with xn = x * rms_scale * gamma."""
    @pl.when(pl.program_id(2) == 0)
    def _():
        acc1[...] = jnp.zeros_like(acc1)
        acc3[...] = jnp.zeros_like(acc3)

    xn = (x_ref[...] * s_ref[...] * g_ref[...]).astype(jnp.bfloat16)
    acc1[...] += jnp.dot(xn, w1_ref[...], preferred_element_type=jnp.float32)
    acc3[...] += jnp.dot(xn, w3_ref[...], preferred_element_type=jnp.float32)

    @pl.when(pl.program_id(2) == pl.num_programs(2) - 1)
    def _():
        a1 = acc1[...]
        o_ref[...] = (a1 * jax.nn.sigmoid(a1) * acc3[...]).astype(o_ref.dtype)


def _rope_kernel(x_ref, c_ref, s_ref, o_ref):
    """Interleaved RoPE: out = x*cos + swap_pairs(x)*sin_signed.
    swap_pairs is built from lane rolls + even/odd select (XLU/VPU work only)."""
    x = x_ref[0]                         # (ts, W)
    w = x.shape[-1]
    nxt = pltpu.roll(x, w - 1, axis=1)   # nxt[j] = x[j+1]
    prv = pltpu.roll(x, 1, axis=1)       # prv[j] = x[j-1]
    lane = jax.lax.broadcasted_iota(jnp.int32, x.shape, 1)
    swapped = jnp.where(lane % 2 == 0, nxt, prv)
    o_ref[0] = x * c_ref[...] + swapped * s_ref[...]


def _flash_kernel(q_ref, k_ref, v_ref, o_ref, m_sc, l_sc, acc_sc, *,
                  scale, tq, tk):
    """Flash attention with online softmax over kv tiles (causal)."""
    qi = pl.program_id(1)
    ki = pl.program_id(2)

    @pl.when(ki == 0)
    def _():
        m_sc[...] = jnp.full_like(m_sc, -jnp.inf)
        l_sc[...] = jnp.zeros_like(l_sc)
        acc_sc[...] = jnp.zeros_like(acc_sc)

    # Skip kv tiles entirely above the causal diagonal.
    @pl.when(ki * tk <= qi * tq + tq - 1)
    def _():
        q = q_ref[...].astype(jnp.bfloat16)            # (bh, tq, Dh)
        k = k_ref[...].astype(jnp.bfloat16)            # (bh, tk, Dh)
        s = jnp.einsum('bqd,bkd->bqk', q, k,
                       preferred_element_type=jnp.float32) * scale
        row = qi * tq + jax.lax.broadcasted_iota(jnp.int32, s.shape, 1)
        col = ki * tk + jax.lax.broadcasted_iota(jnp.int32, s.shape, 2)
        s = jnp.where(col <= row, s, -jnp.inf)

        m_prev = m_sc[...]
        m_new = jnp.maximum(m_prev, jnp.max(s, axis=-1, keepdims=True))
        alpha = jnp.exp(m_prev - m_new)
        p = jnp.exp(s - m_new)
        l_sc[...] = alpha * l_sc[...] + jnp.sum(p, axis=-1, keepdims=True)
        pv = jnp.einsum('bqk,bkd->bqd', p.astype(jnp.bfloat16),
                        v_ref[...].astype(jnp.bfloat16),
                        preferred_element_type=jnp.float32)
        acc_sc[...] = alpha * acc_sc[...] + pv
        m_sc[...] = m_new

    @pl.when(ki == pl.num_programs(2) - 1)
    def _():
        out = acc_sc[...] * pl.reciprocal(l_sc[...], approx=True)
        o_ref[...] = out.astype(o_ref.dtype)


# ------------------------------ kernel wrappers -----------------------------

def _rms_scale(x_pad, eps, tm):
    mp, k = x_pad.shape
    return pl.pallas_call(
        functools.partial(_rms_scale_kernel, eps=eps),
        out_shape=jax.ShapeDtypeStruct((mp, 1), jnp.float32),
        grid=(mp // tm,),
        in_specs=[pl.BlockSpec((tm, k), lambda i: (i, 0))],
        out_specs=pl.BlockSpec((tm, 1), lambda i: (i, 0)),
        compiler_params=pltpu.CompilerParams(
            dimension_semantics=("parallel",), vmem_limit_bytes=VMEM_LIMIT),
    )(x_pad)


def _mm_tiles(m, n, k, tm_cap=256, tn_cap=256, tk_cap=512):
    tm = min(tm_cap, _round_up(m, 8))
    mp = _round_up(m, tm)
    tn = _choose_tile(n, tn_cap, 128)
    tk = _choose_tile(k, tk_cap, 128)
    return tm, mp, tn, tk


def rms_matmul(x, gamma, w, eps):
    """(rmsnorm(x; gamma, eps)) @ W, fused; x:(M,K) f32, gamma:(1,K) f32, W:(K,N) bf16."""
    m, k = x.shape
    _, n = w.shape
    tm, mp, tn, tk = _mm_tiles(m, n, k)
    xp = _pad_rows(x, mp)
    scale = _rms_scale(xp, eps, tm)
    out = pl.pallas_call(
        _rms_mm_kernel,
        out_shape=jax.ShapeDtypeStruct((mp, n), jnp.float32),
        grid=(mp // tm, n // tn, k // tk),
        in_specs=[pl.BlockSpec((tm, tk), lambda i, j, kk: (i, kk)),
                  pl.BlockSpec((1, tk), lambda i, j, kk: (0, kk)),
                  pl.BlockSpec((tm, 1), lambda i, j, kk: (i, 0)),
                  pl.BlockSpec((tk, tn), lambda i, j, kk: (kk, j))],
        out_specs=pl.BlockSpec((tm, tn), lambda i, j, kk: (i, j)),
        scratch_shapes=[pltpu.VMEM((tm, tn), jnp.float32)],
        compiler_params=pltpu.CompilerParams(
            dimension_semantics=("parallel", "parallel", "arbitrary"),
            vmem_limit_bytes=VMEM_LIMIT),
    )(xp, gamma, scale, w)
    return out if mp == m else out[:m]


def matmul_add(x, w, res):
    """x @ W + res, fused residual add; x:(M,K) f32, W:(K,N) bf16, res:(M,N) f32."""
    m, k = x.shape
    _, n = w.shape
    tm, mp, tn, tk = _mm_tiles(m, n, k)
    xp = _pad_rows(x, mp)
    rp = _pad_rows(res, mp)
    out = pl.pallas_call(
        _mm_add_kernel,
        out_shape=jax.ShapeDtypeStruct((mp, n), jnp.float32),
        grid=(mp // tm, n // tn, k // tk),
        in_specs=[pl.BlockSpec((tm, tk), lambda i, j, kk: (i, kk)),
                  pl.BlockSpec((tk, tn), lambda i, j, kk: (kk, j)),
                  pl.BlockSpec((tm, tn), lambda i, j, kk: (i, j))],
        out_specs=pl.BlockSpec((tm, tn), lambda i, j, kk: (i, j)),
        scratch_shapes=[pltpu.VMEM((tm, tn), jnp.float32)],
        compiler_params=pltpu.CompilerParams(
            dimension_semantics=("parallel", "parallel", "arbitrary"),
            vmem_limit_bytes=VMEM_LIMIT),
    )(xp, w, rp)
    return out if mp == m else out[:m]


def rms_swiglu(x, gamma, w1, w3, eps):
    """silu(rmsnorm(x)@W1) * (rmsnorm(x)@W3), all fused in one pallas_call."""
    m, k = x.shape
    _, n = w1.shape
    tm, mp, tn, tk = _mm_tiles(m, n, k)
    xp = _pad_rows(x, mp)
    scale = _rms_scale(xp, eps, tm)
    out = pl.pallas_call(
        _rms_swiglu_kernel,
        out_shape=jax.ShapeDtypeStruct((mp, n), jnp.float32),
        grid=(mp // tm, n // tn, k // tk),
        in_specs=[pl.BlockSpec((tm, tk), lambda i, j, kk: (i, kk)),
                  pl.BlockSpec((1, tk), lambda i, j, kk: (0, kk)),
                  pl.BlockSpec((tm, 1), lambda i, j, kk: (i, 0)),
                  pl.BlockSpec((tk, tn), lambda i, j, kk: (kk, j)),
                  pl.BlockSpec((tk, tn), lambda i, j, kk: (kk, j))],
        out_specs=pl.BlockSpec((tm, tn), lambda i, j, kk: (i, j)),
        scratch_shapes=[pltpu.VMEM((tm, tn), jnp.float32),
                        pltpu.VMEM((tm, tn), jnp.float32)],
        compiler_params=pltpu.CompilerParams(
            dimension_semantics=("parallel", "parallel", "arbitrary"),
            vmem_limit_bytes=VMEM_LIMIT),
    )(xp, gamma, scale, w1, w3)
    return out if mp == m else out[:m]


def rope(x, cos, sin):
    """Interleaved RoPE over the fused QKV output.  x:(B,S,W), cos/sin:(S,W)."""
    b, s, w = x.shape
    ts = _choose_tile(s, 256, 8)
    return pl.pallas_call(
        _rope_kernel,
        out_shape=jax.ShapeDtypeStruct((b, s, w), jnp.float32),
        grid=(b, s // ts),
        in_specs=[pl.BlockSpec((1, ts, w), lambda bi, i: (bi, i, 0)),
                  pl.BlockSpec((ts, w), lambda bi, i: (i, 0)),
                  pl.BlockSpec((ts, w), lambda bi, i: (i, 0))],
        out_specs=pl.BlockSpec((1, ts, w), lambda bi, i: (bi, i, 0)),
        compiler_params=pltpu.CompilerParams(
            dimension_semantics=("parallel", "parallel"),
            vmem_limit_bytes=VMEM_LIMIT),
    )(x, cos, sin)


def flash_attention(q, k, v, head_dim):
    """Causal flash attention.  q/k/v: (B*H, S, Dh) f32."""
    bh_total, s, dh = q.shape
    scale = 1.0 / math.sqrt(head_dim)
    tq = _choose_tile(s, 128, 8)
    tk = _choose_tile(s, 128, 8)
    bh = _choose_tile(bh_total, 8, 1)
    kern = functools.partial(_flash_kernel, scale=scale, tq=tq, tk=tk)
    return pl.pallas_call(
        kern,
        out_shape=jax.ShapeDtypeStruct((bh_total, s, dh), jnp.float32),
        grid=(bh_total // bh, s // tq, s // tk),
        in_specs=[pl.BlockSpec((bh, tq, dh), lambda b, i, j: (b, i, 0)),
                  pl.BlockSpec((bh, tk, dh), lambda b, i, j: (b, j, 0)),
                  pl.BlockSpec((bh, tk, dh), lambda b, i, j: (b, j, 0))],
        out_specs=pl.BlockSpec((bh, tq, dh), lambda b, i, j: (b, i, 0)),
        scratch_shapes=[pltpu.VMEM((bh, tq, 1), jnp.float32),
                        pltpu.VMEM((bh, tq, 1), jnp.float32),
                        pltpu.VMEM((bh, tq, dh), jnp.float32)],
        compiler_params=pltpu.CompilerParams(
            dimension_semantics=("parallel", "parallel", "arbitrary"),
            vmem_limit_bytes=VMEM_LIMIT),
    )(q, k, v)


# ------------------------------ model glue ---------------------------------

def rope_tables(seq_len, n_heads, head_dim, base=10000.0):
    """cos / signed-sin tables for the fused (q|k|v) layout of width 3*H*Dh.
    The v section gets (cos=1, sin=0) so the RoPE kernel is an identity there."""
    inv = 1.0 / (base ** (jnp.arange(0, head_dim, 2, dtype=jnp.float32) / head_dim))
    t = jnp.arange(seq_len, dtype=jnp.float32)
    freqs = jnp.outer(t, inv)                              # (S, Dh//2)
    cos_i = jnp.repeat(jnp.cos(freqs), 2, axis=-1)         # (S, Dh) duplicated pairs
    sin_i = jnp.repeat(jnp.sin(freqs), 2, axis=-1)
    sign = jnp.tile(jnp.array([-1.0, 1.0], jnp.float32), head_dim // 2)
    sin_i = sin_i * sign                                   # (-s, +s, -s, +s, ...)
    hd = n_heads * head_dim
    cos_qk = jnp.tile(cos_i, (1, 2 * n_heads))             # (S, 2*H*Dh)
    sin_qk = jnp.tile(sin_i, (1, 2 * n_heads))
    cos3 = jnp.concatenate([cos_qk, jnp.ones((seq_len, hd), jnp.float32)], axis=-1)
    sin3 = jnp.concatenate([sin_qk, jnp.zeros((seq_len, hd), jnp.float32)], axis=-1)
    return cos3, sin3


def block_forward(p, h, B, S, n_heads, head_dim, eps, cos3, sin3):
    D = n_heads * head_dim
    M = B * S
    x = h.reshape(M, D)

    # ---- attention: fused attention_norm + QKV, RoPE kernel, flash attention,
    #      wo projection with fused residual add ----
    qkv = rms_matmul(x, p["attn_norm"], p["wqkv"], eps)          # (M, 3*H*Dh)
    qkv = rope(qkv.reshape(B, S, 3 * D), cos3, sin3)             # rotate q,k; v identity
    qkv = qkv.reshape(B, S, 3, n_heads, head_dim)
    # TODO(synk): the (B,S,H,Dh)<->(B,H,S,Dh) relayouts below stay in XLA;
    # head_dim=32 < 128 lanes prevents a per-head BlockSpec slice of the lane dim.
    q = qkv[:, :, 0].transpose(0, 2, 1, 3).reshape(B * n_heads, S, head_dim)
    k = qkv[:, :, 1].transpose(0, 2, 1, 3).reshape(B * n_heads, S, head_dim)
    v = qkv[:, :, 2].transpose(0, 2, 1, 3).reshape(B * n_heads, S, head_dim)
    o = flash_attention(q, k, v, head_dim)
    o = o.reshape(B, n_heads, S, head_dim).transpose(0, 2, 1, 3).reshape(M, D)
    h1 = matmul_add(o, p["wo"], x)                               # x + wo(attn)

    # ---- FFN: fused ffn_norm + w1/w3 + SwiGLU, then w2 with fused residual ----
    ff = rms_swiglu(h1, p["ffn_norm"], p["w1"], p["w3"], eps)    # (M, hidden)
    out = matmul_add(ff, p["w2"], h1)                            # h1 + w2(...)
    return out.reshape(B, S, D)


def transformer_forward(params, tokens, cache_info, batch_info,
                        n_heads, head_dim, eps):
    # Only the non-cache path (cache_info[1] == -1, batch_info int) is implemented.
    # TODO(synk): per-layer python-dict xq/xk/xv caching, split_and_pad ragged
    # batching and the layer_id==59 special path are host-side control flow
    # with no clean single-kernel Pallas equivalent.
    assert cache_info[1] == -1 and isinstance(batch_info, int)
    B, S = tokens.shape
    D = n_heads * head_dim
    h = params["tok_embeddings"][tokens]                  # (B, S, D) XLA gather
    cos3, sin3 = rope_tables(S, n_heads, head_dim)
    for lp in params["layers"]:
        h = block_forward(lp, h, B, S, n_heads, head_dim, eps, cos3, sin3)
    logits = rms_matmul(h.reshape(B * S, D), params["norm"], params["output"], eps)
    return logits.reshape(B, S, -1)


# --------------------------- parameter creation ----------------------------

def init_params(key, dim, n_layers, n_heads, vocab_size, multiple_of):
    head_dim = dim // n_heads
    hidden = int(2 * (4 * dim) / 3)
    hidden = multiple_of * ((hidden + multiple_of - 1) // multiple_of)
    scale = 0.02

    def nrm(k, shape, dtype=jnp.bfloat16):
        return (scale * jax.random.normal(k, shape, dtype=jnp.float32)).astype(dtype)

    keys = jax.random.split(key, 2 + n_layers)
    params = {
        "tok_embeddings": nrm(keys[0], (vocab_size, dim), jnp.float32),
        "norm": jnp.ones((1, dim), jnp.float32),
        "output": nrm(keys[1], (dim, vocab_size)),        # bf16 weight
        "layers": [],
    }
    for li in range(n_layers):
        lk = jax.random.split(keys[2 + li], 6)
        wqk = nrm(lk[0], (dim, 2 * n_heads * head_dim))
        wv = nrm(lk[1], (dim, n_heads * head_dim))
        params["layers"].append({
            "wqkv": jnp.concatenate([wqk, wv], axis=1),   # fused (dim, 3*H*Dh) bf16
            "wo": nrm(lk[2], (n_heads * head_dim, dim)),
            "w1": nrm(lk[3], (dim, hidden)),
            "w2": nrm(lk[4], (hidden, dim)),
            "w3": nrm(lk[5], (dim, hidden)),
            "attn_norm": jnp.ones((1, dim), jnp.float32),
            "ffn_norm": jnp.ones((1, dim), jnp.float32),
        })
    return params, head_dim, hidden


# --------------------------------- main ------------------------------------

if __name__ == "__main__":
    DIM = 128
    N_LAYERS = 2
    N_HEADS = 4
    VOCAB = 256
    MULTIPLE_OF = 256
    NORM_EPS = 1e-5
    B, S = 2, 8

    key = jax.random.PRNGKey(0)
    kp, kt = jax.random.split(key)
    params, head_dim, hidden = init_params(kp, DIM, N_LAYERS, N_HEADS,
                                           VOCAB, MULTIPLE_OF)
    tokens = jax.random.randint(kt, (B, S), 0, VOCAB, dtype=jnp.int32)

    cache_info = (0, -1, 1)   # seqlen_offset=0, cache_key=-1 (non-cache), follow_num=1
    batch_info = 0            # int -> _remove_padding is identity

    logits = transformer_forward(params, tokens, cache_info, batch_info,
                                 N_HEADS, head_dim, NORM_EPS)
    logits = jax.block_until_ready(logits)
    assert logits.shape == (B, S, VOCAB)
    assert bool(jnp.all(jnp.isfinite(logits)))
    print("KERNEL_OK")
</pallas_src>

<mosaic_0001>
module attributes {stable_mosaic.version = 11 : i64} {
  func.func @_rms_scale_kernel(%arg0: i32, %arg1: memref<16x128xf32, #tpu.memory_space<vmem>>, %arg2: memref<16x1xf32, #tpu.memory_space<vmem>>) attributes {dimension_semantics = [#tpu.dimension_semantics<parallel>], iteration_bounds = array<i64: 1>, scalar_prefetch = 0 : i64, scratch_operands = 0 : i64, tpu.core_type = #tpu.core_type<tc>, window_params = [{transform_indices = @transform_0, window_bounds = array<i64: 16, 128>}, {transform_indices = @transform_1, window_bounds = array<i64: 16, 1>}]} {
    %c0 = arith.constant 0 : index
    %c0_0 = arith.constant 0 : index
    %0 = vector.load %arg1[%c0, %c0_0] : memref<16x128xf32, #tpu.memory_space<vmem>>, vector<16x128xf32>
    %1 = arith.mulf %0, %0 : vector<16x128xf32>
    %cst = arith.constant dense<0.000000e+00> : vector<16xf32>
    %2 = vector.multi_reduction <add>, %1, %cst [1] : vector<16x128xf32> to vector<16xf32>
    %3 = vector.shape_cast %2 : vector<16xf32> to vector<16x1xf32>
    %cst_1 = arith.constant 1.280000e+02 : f32
    %4 = vector.broadcast %cst_1 : f32 to vector<16x1xf32>
    %5 = arith.divf %3, %4 : vector<16x1xf32>
    %cst_2 = arith.constant 9.99999974E-6 : f32
    %6 = vector.broadcast %cst_2 : f32 to vector<16x1xf32>
    %7 = arith.addf %5, %6 : vector<16x1xf32>
    %8 = math.rsqrt %7 : vector<16x1xf32>
    %c0_3 = arith.constant 0 : index
    %c0_4 = arith.constant 0 : index
    %9 = vector.load %arg2[%c0_3, %c0_4] : memref<16x1xf32, #tpu.memory_space<vmem>>, vector<16x1xf32>
    tpu.vector_store %arg2[%c0_3, %c0_4], %8 {strides = array<i32>} : memref<16x1xf32, #tpu.memory_space<vmem>>, vector<16x1xf32>,
    return
  }
  func.func @transform_0(%arg0: i32) -> (i32, i32) {
    %c0_i32 = arith.constant 0 : i32
    %c0_i32_0 = arith.constant 0 : i32
    return %arg0, %c0_i32 : i32, i32
  }
  func.func @transform_1(%arg0: i32) -> (i32, i32) {
    %c0_i32 = arith.constant 0 : i32
    %c0_i32_0 = arith.constant 0 : i32
    return %arg0, %c0_i32 : i32, i32
  }
}

</mosaic_0001>

<llo_original>
// kernel: tpu_custom_call.1
$region0: #{tpu_custom_call.1}
  #allocation0 [shape = 'u32[]', space=smem, size = 0x4, offset = 0x4, fixed_abs, tag = 'smem constant byte address 0x4 - core index']
  #allocation1 [shape = 'u32[144,128]{1,0:T(1,128)}', space=vmem, size = 0x12000, scoped, tag = 'internal scratch']
  %s0 = inlined_call_operand.hbm [shape: f32[16,128], index: 0, kind: input, shape index: {}]
  %s1 = inlined_call_operand.vmem [shape: f32[16,1], index: 1, kind: output, shape index: {}]
  %s2 = sld [smem:[#allocation0]]
  $region18: #{tpu_custom_call.1} parent=0
    _
  %s4 = ssub.s32 1, %s2
  %s5 = scalar_select 0, %s4, %s2
  $region1: #{tpu_custom_call.1} parent=0
    #allocation2 [shape = 'u8[8192]{0}', space=vmem, size = 0x2000, scoped, tag = 'input window, operand 0, single buffered']
    #allocation3 [shape = 's32[1]{0}', space=sflag, size = 0x4, scoped, tag = 'scoped memory for tpu_custom_call.1']
    %6 = vsyncpa [#allocation3], 0
    // Predicated region
    $region2: #{tpu_custom_call.1} parent=1 // pred_check
      _
    $region3: #{tpu_custom_call.1} parent=1 // pred_check_branch
      %8 = sbr.rel (0) target = $region5
    $region4: #{tpu_custom_call.1} parent=1 // pred_region
      %s10 = ssub.s32 256, 256
      %11 = vsyncadd [#allocation3], %s10
      %s12 = sshll.u32 [#allocation2], 4
      %s13 = int_to_ptr.vmem [resolvable:$true] %s12
      %18 = dma.hbm_to_vmem [thread:$0]  %s0, 256, %s13, [#allocation3], 128, 128, 8
    $region5: #{tpu_custom_call.1} parent=1 // pred_fallthru
      _
    // Predicated region
    $region6: #{tpu_custom_call.1} parent=1 // pred_check
      _
    $region7: #{tpu_custom_call.1} parent=1 // pred_check_branch
      %20 = sbr.rel (0) target = $region9
    $region8: #{tpu_custom_call.1} parent=1 // pred_region
      %21 = dma.done [#allocation3], 256
    $region9: #{tpu_custom_call.1} parent=1 // pred_fallthru
      _
    %v22 = vld [vmem:[#allocation2] sm:$0xff]
    %v23 = vld [vmem:[#allocation2 + $0x8] sm:$0xff]
    %v24 = vmul.f32 %v22, %v22
    %v25 = vmul.f32 %v23, %v23
    %26 = vadd.xlane.f32.xlu0 %v24
    %v27 = vpop.xlane.xlu0 %26
    %28 = vadd.xlane.f32.xlu0 %v25
    %v29 = vpop.xlane.xlu0 %28
    %v30 = vrcp.pop 128.0
    %v31 = vmul.f32 %v27, %v30
    %v32 = vmul.f32 %v29, %v30
    %v33 = vadd.f32 %v31, 1e-05
    %v34 = vadd.f32 %v32, 1e-05
    %v35 = vrsqrt.pop %v33
    %v36 = vrsqrt.pop %v34
    %vm37 = vcmask 7168
    %38 = vst.msk [vmem:[%s1] sm:$0xff] %vm37, %v35
    %39 = vst.msk [vmem:[%s1 + $0x8] sm:$0xff] %vm37, %v36
    // Predicated region
    $region10: #{tpu_custom_call.1} parent=1 // pred_check
      _
    $region11: #{tpu_custom_call.1} parent=1 // pred_check_branch
      %41 = sbr.rel (0) target = $region13
    $region12: #{tpu_custom_call.1} parent=1 // pred_region
      _
    $region13: #{tpu_custom_call.1} parent=1 // pred_fallthru
      _
    // Predicated region
    $region14: #{tpu_custom_call.1} parent=1 // pred_check
      _
    $region15: #{tpu_custom_call.1} parent=1 // pred_check_branch
      %43 = sbr.rel (0) target = $region17
    $region16: #{tpu_custom_call.1} parent=1 // pred_region
      _
    $region17: #{tpu_custom_call.1} parent=1 // pred_fallthru
      _
    %44 = vsyncpa [#allocation3], 1

</llo_original>
